<compile_context>
chip_gen: v7x
topology: tpu7x:2x2x1
jax: 0.10.0
libtpu: 0.0.40
codegen_flags: <defaults>
</compile_context>

<pallas_src>
import functools

import jax
import jax.numpy as jnp
from jax.experimental import pallas as pl
from jax.experimental.pallas import tpu as pltpu


def _round_up(x, m):
    return ((x + m - 1) // m) * m


def _tpu_budgets():
    """Generation-aware block-size target / scoped-VMEM limits (bytes)."""
    kind = ""
    try:
        kind = jax.devices()[0].device_kind.lower()
    except Exception:
        pass
    if "v7" in kind:
        # 64 MiB physical VMEM, ~3.2 TB/s HBM: large blocks, tight VMEM cap.
        return {"target": 8 << 20, "vmem_limit": 52 << 20, "fused_cap": 44 << 20}
    if "v6" in kind:
        # 128 MiB physical VMEM, ~1.4 TB/s HBM.
        return {"target": 8 << 20, "vmem_limit": 96 << 20, "fused_cap": 80 << 20}
    # v5e / unknown (v5e default scoped limit is only 16 MiB, so raise it).
    return {"target": 4 << 20, "vmem_limit": 64 << 20, "fused_cap": 56 << 20}


def _choose_tile_hw(C, hw, dtype_bytes, target_bytes):
    """Largest 128-multiple lane tile under ~target_bytes per (C, TILE) block.
    No divisibility requirement: the ragged last tile is masked in-kernel."""
    c_phys = _round_up(max(C, 8), 8)
    lanes = (target_bytes // max(1, c_phys * dtype_bytes)) // 128 * 128
    lanes = max(128, min(lanes, 1 << 17))
    return min(lanes, _round_up(hw, 128))


# ---------------------------------------------------------------------------
# Fused single-pass kernel: pool + gate + scale, one batch element per step.
# ---------------------------------------------------------------------------
def _fused_ca_kernel(x_ref, w1t_ref, w2_ref, o_ref, *, inv_hw):
    # x_ref: (C, HW) slab.  w1t_ref: (C, C_red) f32 (= w1.T).  w2_ref: (C, C_red) f32.
    x = x_ref[...]
    pooled = jnp.sum(x.astype(jnp.float32), axis=-1, keepdims=True) * inv_hw     # (C, 1)
    # Gate via broadcast-multiply + cross-sublane / cross-lane reductions
    # (f32 exact; avoids tiny MXU matmuls and transposes).
    y1 = jnp.maximum(jnp.sum(w1t_ref[...] * pooled, axis=0, keepdims=True), 0.0)  # (1, Cr)
    gate = jax.nn.sigmoid(jnp.sum(w2_ref[...] * y1, axis=-1, keepdims=True))      # (C, 1)
    o_ref[...] = x * gate.astype(x.dtype)


# ---------------------------------------------------------------------------
# Two-pass fallback kernels.
# ---------------------------------------------------------------------------
def _pool_sum_kernel(x_ref, sum_ref, *, hw, tile_hw):
    t = pl.program_id(1)

    @pl.when(t == 0)
    def _():
        sum_ref[...] = jnp.zeros_like(sum_ref)

    xb = x_ref[...].astype(jnp.float32)
    if hw % tile_hw != 0:
        # Partial-block *reads* are not masked by Pallas: zero OOB lanes of the
        # ragged last tile so the channel sums stay exact.
        lane = jax.lax.broadcasted_iota(jnp.int32, xb.shape, xb.ndim - 1)
        xb = jnp.where(t * tile_hw + lane < hw, xb, 0.0)
    sum_ref[...] += jnp.sum(xb, axis=-1, keepdims=True)


def _scale_kernel(x_ref, g_ref, o_ref):
    # OOB lanes of a ragged last tile are never stored (masked partial store),
    # so no read mask is needed here.
    o_ref[...] = x_ref[...] * g_ref[...]


# ---------------------------------------------------------------------------
# Wrapper.
# ---------------------------------------------------------------------------
@functools.partial(jax.jit, static_argnames=("force_two_pass", "tile_override"))
def ca_layer(x_nchw, w1, w2, *, force_two_pass=False, tile_override=None):
    """Channel attention. x: (N, C, H, W), w1: (C_red, C), w2: (C, C_red)."""
    N, C, H, W = x_nchw.shape
    HW = H * W
    dtype = x_nchw.dtype
    dtype_bytes = jnp.dtype(dtype).itemsize

    budgets = _tpu_budgets()
    x = x_nchw.reshape(N, C, HW)

    # ---- fused single-pass path when one slab fits the VMEM budget ----------
    c_phys = _round_up(max(C, 8), 8)
    hw_lanes = _round_up(HW, 128)
    slab_phys = c_phys * hw_lanes * dtype_bytes
    # in + out double-buffered, plus a possible f32 widened temp for the reduce.
    fused_need = 4 * slab_phys + c_phys * hw_lanes * 4 + (1 << 20)

    if (not force_two_pass) and fused_need <= budgets["fused_cap"]:
        C_red = w1.shape[0]
        w1t = w1.astype(jnp.float32).T            # (C, C_red)
        w2f = w2.astype(jnp.float32)              # (C, C_red)
        out = pl.pallas_call(
            functools.partial(_fused_ca_kernel, inv_hw=1.0 / HW),
            out_shape=jax.ShapeDtypeStruct((N, C, HW), dtype),
            grid_spec=pltpu.PrefetchScalarGridSpec(
                num_scalar_prefetch=0,
                grid=(N,),
                in_specs=[
                    pl.BlockSpec((None, C, HW), lambda n: (n, 0, 0)),
                    pl.BlockSpec((C, C_red), lambda n: (0, 0)),
                    pl.BlockSpec((C, C_red), lambda n: (0, 0)),
                ],
                out_specs=pl.BlockSpec((None, C, HW), lambda n: (n, 0, 0)),
            ),
            compiler_params=pltpu.CompilerParams(
                dimension_semantics=("parallel",),
                vmem_limit_bytes=budgets["vmem_limit"],
            ),
        )(x, w1t, w2f)
        return out.reshape(N, C, H, W)

    # ---- two-pass fallback for large slabs -----------------------------------
    tile_hw = tile_override if tile_override is not None else _choose_tile_hw(
        C, HW, dtype_bytes, budgets["target"])
    assert tile_hw % 128 == 0
    num_tiles = pl.cdiv(HW, tile_hw)

    # pass 1: per-channel spatial sums (tiled reduction, no jnp.pad of x).
    # TODO(synk): on v7x with N==1 split the spatial axis into 2 parallel
    # partial-sum chunks so both TensorCores work during the reduction.
    sums = pl.pallas_call(
        functools.partial(_pool_sum_kernel, hw=HW, tile_hw=tile_hw),
        out_shape=jax.ShapeDtypeStruct((N, C, 1), jnp.float32),
        grid_spec=pltpu.PrefetchScalarGridSpec(
            num_scalar_prefetch=0,
            grid=(N, num_tiles),
            in_specs=[pl.BlockSpec((None, C, tile_hw), lambda n, t: (n, 0, t))],
            out_specs=pl.BlockSpec((None, C, 1), lambda n, t: (n, 0, 0)),
        ),
        compiler_params=pltpu.CompilerParams(
            dimension_semantics=("parallel", "arbitrary"),
            vmem_limit_bytes=budgets["vmem_limit"],
        ),
    )(x)

    # gate: tiny (N, C) matmuls + ReLU + sigmoid in plain XLA (negligible work).
    pooled = sums[:, :, 0] * (1.0 / HW)                                   # (N, C) f32
    y1 = jnp.maximum(jnp.dot(pooled, w1.astype(jnp.float32).T,
                             precision=jax.lax.Precision.HIGHEST), 0.0)   # (N, C_red)
    gate = jax.nn.sigmoid(jnp.dot(y1, w2.astype(jnp.float32).T,
                                  precision=jax.lax.Precision.HIGHEST))   # (N, C)
    gate = gate.astype(dtype)[:, :, None]                                 # (N, C, 1)

    # pass 2: streaming gated scale; ragged last tile via masked partial stores.
    # TODO(synk): alias x -> out via input_output_aliases when the caller donates x.
    out = pl.pallas_call(
        _scale_kernel,
        out_shape=jax.ShapeDtypeStruct((N, C, HW), dtype),
        grid_spec=pltpu.PrefetchScalarGridSpec(
            num_scalar_prefetch=0,
            grid=(N, num_tiles),
            in_specs=[
                pl.BlockSpec((None, C, tile_hw), lambda n, t: (n, 0, t)),
                pl.BlockSpec((None, C, 1), lambda n, t: (n, 0, 0)),
            ],
            out_specs=pl.BlockSpec((None, C, tile_hw), lambda n, t: (n, 0, t)),
        ),
        compiler_params=pltpu.CompilerParams(
            dimension_semantics=("parallel", "parallel"),
            vmem_limit_bytes=budgets["vmem_limit"],
        ),
    )(x, gate)

    return out.reshape(N, C, H, W)


# ---------------------------------------------------------------------------
# Reference + tests.
# ---------------------------------------------------------------------------
def _reference(x, w1, w2):
    pooled = jnp.mean(x.astype(jnp.float32), axis=(2, 3))                 # (N, C)
    y1 = jnp.maximum(jnp.dot(pooled, w1.astype(jnp.float32).T,
                             precision=jax.lax.Precision.HIGHEST), 0.0)
    y2 = jax.nn.sigmoid(jnp.dot(y1, w2.astype(jnp.float32).T,
                                precision=jax.lax.Precision.HIGHEST))
    return x * y2.astype(x.dtype)[:, :, None, None]


if __name__ == "__main__":
    root_key = jax.random.PRNGKey(0)

    def make_inputs(key, N, C, H, W, reduction):
        kx, k1, k2 = jax.random.split(key, 3)
        C_red = C // reduction
        x = jax.random.normal(kx, (N, C, H, W), dtype=jnp.float32)
        w1 = jax.random.normal(k1, (C_red, C), dtype=jnp.float32) * 0.1   # Conv2d(C, C//r, 1)
        w2 = jax.random.normal(k2, (C, C_red), dtype=jnp.float32) * 0.1   # Conv2d(C//r, C, 1)
        return x, w1, w2

    # (N, C, H, W, reduction, force_two_pass, tile_override)
    cases = [
        (2, 32, 16, 16, 4, False, None),   # fused single-pass path (main config)
        (2, 32, 16, 16, 4, True,  None),   # two-pass path, HW % 128 == 0
        (1, 16, 10, 13, 4, True,  128),    # two-pass, ragged last tile (mask + partial store)
        (2, 32,  9,  9, 4, False, None),   # fused path, HW not a multiple of 128
    ]

    for idx, (N, C, H, W, red, two_pass, tile) in enumerate(cases):
        x, w1, w2 = make_inputs(jax.random.fold_in(root_key, idx), N, C, H, W, red)
        out = jax.block_until_ready(
            ca_layer(x, w1, w2, force_two_pass=two_pass, tile_override=tile))
        ref = _reference(x, w1, w2)
        assert out.shape == x.shape, f"shape mismatch in case {idx}"
        assert jnp.allclose(out, ref, atol=2e-5, rtol=2e-5), f"mismatch vs reference in case {idx}"

    print("KERNEL_OK")
</pallas_src>

<mosaic_0001>
module attributes {stable_mosaic.version = 11 : i64} {
  func.func @_fused_ca_kernel(%arg0: i32, %arg1: memref<1x32x256xf32, #tpu.memory_space<vmem>>, %arg2: memref<32x8xf32, #tpu.memory_space<vmem>>, %arg3: memref<32x8xf32, #tpu.memory_space<vmem>>, %arg4: memref<1x32x256xf32, #tpu.memory_space<vmem>>) attributes {dimension_semantics = [#tpu.dimension_semantics<parallel>], iteration_bounds = array<i64: 2>, scalar_prefetch = 0 : i64, scratch_operands = 0 : i64, tpu.core_type = #tpu.core_type<tc>, window_params = [{transform_indices = @transform_0, window_bounds = array<i64: 1, 32, 256>}, {pipeline_mode = #tpu.pipeline_mode<synchronous>, transform_indices = @transform_1, window_bounds = array<i64: 32, 8>}, {pipeline_mode = #tpu.pipeline_mode<synchronous>, transform_indices = @transform_2, window_bounds = array<i64: 32, 8>}, {transform_indices = @transform_3, window_bounds = array<i64: 1, 32, 256>}]} {
    %c0 = arith.constant 0 : index
    %c0_0 = arith.constant 0 : index
    %c0_1 = arith.constant 0 : index
    %0 = vector.load %arg1[%c0, %c0_0, %c0_1] : memref<1x32x256xf32, #tpu.memory_space<vmem>>, vector<1x32x256xf32>
    %1 = vector.shape_cast %0 : vector<1x32x256xf32> to vector<32x256xf32>
    %cst = arith.constant dense<0.000000e+00> : vector<32xf32>
    %2 = vector.multi_reduction <add>, %1, %cst [1] : vector<32x256xf32> to vector<32xf32>
    %3 = vector.shape_cast %2 : vector<32xf32> to vector<32x1xf32>
    %cst_2 = arith.constant 3.906250e-03 : f32
    %4 = vector.broadcast %cst_2 : f32 to vector<32x1xf32>
    %5 = arith.mulf %3, %4 : vector<32x1xf32>
    %c0_3 = arith.constant 0 : index
    %c0_4 = arith.constant 0 : index
    %6 = vector.load %arg2[%c0_3, %c0_4] : memref<32x8xf32, #tpu.memory_space<vmem>>, vector<32x8xf32>
    %7 = vector.broadcast %5 : vector<32x1xf32> to vector<32x8xf32>
    %8 = arith.mulf %6, %7 : vector<32x8xf32>
    %cst_5 = arith.constant dense<0.000000e+00> : vector<8xf32>
    %9 = vector.multi_reduction <add>, %8, %cst_5 [0] : vector<32x8xf32> to vector<8xf32>
    %10 = vector.shape_cast %9 : vector<8xf32> to vector<1x8xf32>
    %cst_6 = arith.constant 0.000000e+00 : f32
    %11 = vector.broadcast %cst_6 : f32 to vector<1x8xf32>
    %12 = arith.maximumf %10, %11 : vector<1x8xf32>
    %c0_7 = arith.constant 0 : index
    %c0_8 = arith.constant 0 : index
    %13 = vector.load %arg3[%c0_7, %c0_8] : memref<32x8xf32, #tpu.memory_space<vmem>>, vector<32x8xf32>
    %14 = vector.broadcast %12 : vector<1x8xf32> to vector<32x8xf32>
    %15 = arith.mulf %13, %14 : vector<32x8xf32>
    %cst_9 = arith.constant dense<0.000000e+00> : vector<32xf32>
    %16 = vector.multi_reduction <add>, %15, %cst_9 [1] : vector<32x8xf32> to vector<32xf32>
    %17 = vector.shape_cast %16 : vector<32xf32> to vector<32x1xf32>
    %18 = arith.negf %17 : vector<32x1xf32>
    %19 = math.exp %18 : vector<32x1xf32>
    %cst_10 = arith.constant 1.000000e+00 : f32
    %20 = vector.broadcast %cst_10 : f32 to vector<32x1xf32>
    %21 = arith.addf %20, %19 : vector<32x1xf32>
    %22 = arith.divf %20, %21 : vector<32x1xf32>
    %23 = vector.broadcast %22 : vector<32x1xf32> to vector<32x256xf32>
    %24 = arith.mulf %1, %23 : vector<32x256xf32>
    %c0_11 = arith.constant 0 : index
    %c0_12 = arith.constant 0 : index
    %c0_13 = arith.constant 0 : index
    %25 = vector.load %arg4[%c0_11, %c0_12, %c0_13] : memref<1x32x256xf32, #tpu.memory_space<vmem>>, vector<1x32x256xf32>
    %26 = vector.shape_cast %25 : vector<1x32x256xf32> to vector<32x256xf32>
    %27 = vector.shape_cast %24 : vector<32x256xf32> to vector<1x32x256xf32>
    tpu.vector_store %arg4[%c0_11, %c0_12, %c0_13], %27 {strides = array<i32>} : memref<1x32x256xf32, #tpu.memory_space<vmem>>, vector<1x32x256xf32>,
    return
  }
  func.func @transform_0(%arg0: i32) -> (i32, i32, i32) {
    %c0_i32 = arith.constant 0 : i32
    %c0_i32_0 = arith.constant 0 : i32
    %c0_i32_1 = arith.constant 0 : i32
    return %arg0, %c0_i32, %c0_i32_0 : i32, i32, i32
  }
  func.func @transform_1(%arg0: i32) -> (i32, i32) {
    %c0_i32 = arith.constant 0 : i32
    %c0_i32_0 = arith.constant 0 : i32
    %c0_i32_1 = arith.constant 0 : i32
    return %c0_i32, %c0_i32_0 : i32, i32
  }
  func.func @transform_2(%arg0: i32) -> (i32, i32) {
    %c0_i32 = arith.constant 0 : i32
    %c0_i32_0 = arith.constant 0 : i32
    %c0_i32_1 = arith.constant 0 : i32
    return %c0_i32, %c0_i32_0 : i32, i32
  }
  func.func @transform_3(%arg0: i32) -> (i32, i32, i32) {
    %c0_i32 = arith.constant 0 : i32
    %c0_i32_0 = arith.constant 0 : i32
    %c0_i32_1 = arith.constant 0 : i32
    return %arg0, %c0_i32, %c0_i32_0 : i32, i32, i32
  }
}

</mosaic_0001>

<llo_original>
// kernel: ca_layer.1
$region0: #{ca_layer.1}
  #allocation0 [shape = 'u32[]', space=smem, size = 0x4, offset = 0x4, fixed_abs, tag = 'smem constant byte address 0x4 - core index']
  #allocation1 [shape = 'u32[144,128]{1,0:T(1,128)}', space=vmem, size = 0x12000, scoped, tag = 'internal scratch']
  %s0 = inlined_call_operand.hbm [shape: f32[2,32,256], index: 0, kind: input, shape index: {}]
  %s1 = inlined_call_operand.hbm [shape: f32[32,8], index: 1, kind: input, shape index: {}]
  %s2 = inlined_call_operand.hbm [shape: f32[32,8], index: 2, kind: input, shape index: {}]
  %s3 = inlined_call_operand.hbm [shape: f32[2,32,256], index: 3, kind: output, shape index: {}]
  %s4 = sld [smem:[#allocation0]]
  $region57: #{ca_layer.1} parent=0
    _
  %s6 = ssub.s32 1, %s4
  %s7 = scalar_select 0, %s6, %s4
  $region1: #{ca_layer.1} parent=0
    #allocation2 [shape = 'u8[65536]{0}', space=vmem, size = 0x10000, scoped, tag = 'input window, operand 0']
    #allocation3 [shape = 's32[2]{0}', space=sflag, size = 0x8, scoped, tag = 'scoped memory for ca_layer.1']
    #allocation4 [shape = 's32[2]{0}', space=sflag, size = 0x8, scoped, tag = 'scoped memory for ca_layer.1']
    #allocation5 [shape = 'u8[16384]{0}', space=vmem, size = 0x4000, scoped, tag = 'input window, operand 1, single buffered']
    #allocation6 [shape = 's32[1]{0}', space=sflag, size = 0x4, scoped, tag = 'scoped memory for ca_layer.1']
    #allocation7 [shape = 'u8[16384]{0}', space=vmem, size = 0x4000, scoped, tag = 'input window, operand 2, single buffered']
    #allocation8 [shape = 'u8[65536]{0}', space=vmem, size = 0x10000, scoped, tag = 'output window, operand 0']
    %8 = vsyncpa [#allocation3], 0
    %s9 = scalar_lea.sflag [#allocation3], 1
    %10 = vsyncpa %s9, 0
    %11 = vsyncpa [#allocation6], 0
    %12 = vsyncpa [#allocation4], 0
    %s13 = scalar_lea.sflag [#allocation4], 1
    %14 = vsyncpa %s13, 0
    loop: start=0, step=1, limit=4
    $region2: #{ca_layer.1} parent=1 // loop_pre_header
      _
    $region3: #{ca_layer.1} parent=1 // loop_header
      %s16 = sphi 0, %s20
      %p17 = scmp.ge.s32.totalorder %s16, 4
      %s26 = sphi 0, %s28
      %s29 = sphi 0, %s26
      %s30 = sphi 0, %s29
      %s46 = sphi 0, %s30
      %s50 = sphi 0, %s50
      %s52 = sphi 0, %s50
      %s53 = sphi 0, %s52
      %s67 = sphi 0, %s53
      %s71 = sphi 0, %s71
      %s73 = sphi 0, %s71
      %s74 = sphi 0, %s73
      %s88 = sphi 0, %s74
      %s94 = sphi 0, %s96
      %s97 = sphi 0, %s94
      %s98 = sphi 0, %s97
      %s114 = sphi 0, %s98
    $region4: #{ca_layer.1} parent=1 // loop_header_branch
      %19 = sbr.rel (%p17) target = $region8
    $region5: #{ca_layer.1} parent=1 // loop_body
      %s21 = ssub.s32 %s16, 1
      %s22 = ssub.s32 %s16, 2
      %s23 = sadd.s32 %s16, 1
      %s24 = ssub.s32 %s16, %s23
      %p25 = scmp.eq.s32.totalorder %s24, 0
      %s27 = sadd.s32 %s26, 1
      %s28 = scalar_select %p25, %s26, %s27
      %p31 = pneg %p25
      %p32 = scmp.eq.s32.totalorder %s16, 1
      %p33 = por %p31, %p32
      %p34 = scmp.ne.s32.totalorder %s26, %s29
      %p35 = scmp.eq.s32.totalorder %s16, 0
      %p36 = por %p34, %p35
      %p37 = scmp.ne.s32.totalorder %s26, %s29
      %p38 = scmp.eq.s32.totalorder %s21, 1
      %p39 = por %p37, %p38
      %p40 = scmp.ne.s32.totalorder %s29, %s30
      %p41 = scmp.eq.s32.totalorder %s21, 0
      %p42 = por %p40, %p41
      %p43 = scmp.ne.s32.totalorder %s29, %s30
      %p44 = scmp.eq.s32.totalorder %s22, 1
      %p45 = por %p43, %p44
      %p47 = scmp.ne.s32.totalorder %s30, %s46
      %p48 = scmp.eq.s32.totalorder %s22, 0
      %p49 = por %p47, %p48
      %s51 = sadd.s32 %s50, 1
      %p54 = scmp.eq.s32.totalorder %s16, 1
      %p55 = scmp.ne.s32.totalorder %s50, %s52
      %p56 = scmp.eq.s32.totalorder %s16, 0
      %p57 = por %p55, %p56
      %p58 = scmp.ne.s32.totalorder %s50, %s52
      %p59 = scmp.eq.s32.totalorder %s21, 1
      %p60 = por %p58, %p59
      %p61 = scmp.ne.s32.totalorder %s52, %s53
      %p62 = scmp.eq.s32.totalorder %s21, 0
      %p63 = por %p61, %p62
      %p64 = scmp.ne.s32.totalorder %s52, %s53
      %p65 = scmp.eq.s32.totalorder %s22, 1
      %p66 = por %p64, %p65
      %p68 = scmp.ne.s32.totalorder %s53, %s67
      %p69 = scmp.eq.s32.totalorder %s22, 0
      %p70 = por %p68, %p69
      %s72 = sadd.s32 %s71, 1
      %p75 = scmp.eq.s32.totalorder %s16, 1
      %p76 = scmp.ne.s32.totalorder %s71, %s73
      %p77 = scmp.eq.s32.totalorder %s16, 0
      %p78 = por %p76, %p77
      %p79 = scmp.ne.s32.totalorder %s71, %s73
      %p80 = scmp.eq.s32.totalorder %s21, 1
      %p81 = por %p79, %p80
      %p82 = scmp.ne.s32.totalorder %s73, %s74
      %p83 = scmp.eq.s32.totalorder %s21, 0
      %p84 = por %p82, %p83
      %p85 = scmp.ne.s32.totalorder %s73, %s74
      %p86 = scmp.eq.s32.totalorder %s22, 1
      %p87 = por %p85, %p86
      %p89 = scmp.ne.s32.totalorder %s74, %s88
      %p90 = scmp.eq.s32.totalorder %s22, 0
      %p91 = por %p89, %p90
      %s92 = ssub.s32 %s16, %s23
      %p93 = scmp.eq.s32.totalorder %s92, 0
      %s95 = sadd.s32 %s94, 1
      %s96 = scalar_select %p93, %s94, %s95
      %p99 = pneg %p93
      %p100 = scmp.eq.s32.totalorder %s16, 1
      %p101 = por %p99, %p100
      %p102 = scmp.ne.s32.totalorder %s94, %s97
      %p103 = scmp.eq.s32.totalorder %s16, 0
      %p104 = por %p102, %p103
      %p105 = scmp.ne.s32.totalorder %s94, %s97
      %p106 = scmp.eq.s32.totalorder %s21, 1
      %p107 = por %p105, %p106
      %p108 = scmp.ne.s32.totalorder %s97, %s98
      %p109 = scmp.eq.s32.totalorder %s21, 0
      %p110 = por %p108, %p109
      %p111 = scmp.ne.s32.totalorder %s97, %s98
      %p112 = scmp.eq.s32.totalorder %s22, 1
      %p113 = por %p111, %p112
      %p115 = scmp.ne.s32.totalorder %s98, %s114
      %p116 = scmp.eq.s32.totalorder %s22, 0
      %p117 = por %p115, %p116
      %p118 = scmp.le.s32.totalorder 1, %s16
      %p119 = scmp.lt.s32.totalorder %s16, 3
      %p120 = pnand %p118, %p119
      %p121 = pneg %p120
      // Predicated region
      $region9: #{ca_layer.1} parent=5 // pred_check
        _
      $region10: #{ca_layer.1} parent=5 // pred_check_branch
        %123 = sbr.rel (%p120) target = $region12
      $region11: #{ca_layer.1} parent=5 // pred_region
        %s124 = ssub.s32 %s16, 1
        // Predicated region
        $region13: #{ca_layer.1} parent=11 // pred_check
          %p125 = pneg %p63
        $region14: #{ca_layer.1} parent=11 // pred_check_branch
          %127 = sbr.rel (%p125) target = $region16
        $region15: #{ca_layer.1} parent=11 // pred_region
          %s129 = ssub.s32 512, 512
          %130 = vsyncadd [#allocation6], %s129
          %s131 = sshll.u32 [#allocation5], 4
          %s132 = int_to_ptr.vmem [resolvable:$true] %s131
          %137 = dma.hbm_to_vmem [thread:$0]  %s1, 512, %s132, [#allocation6], 128, 128, 8
        $region16: #{ca_layer.1} parent=11 // pred_fallthru
          _
        // Predicated region
        $region17: #{ca_layer.1} parent=11 // pred_check
          %p138 = pneg %p84
        $region18: #{ca_layer.1} parent=11 // pred_check_branch
          %140 = sbr.rel (%p138) target = $region20
        $region19: #{ca_layer.1} parent=11 // pred_region
          %s142 = ssub.s32 512, 512
          %143 = vsyncadd [#allocation6], %s142
          %s144 = sshll.u32 [#allocation7], 4
          %s145 = int_to_ptr.vmem [resolvable:$true] %s144
          %150 = dma.hbm_to_vmem [thread:$0]  %s2, 512, %s145, [#allocation6], 128, 128, 8
        $region20: #{ca_layer.1} parent=11 // pred_fallthru
          _
      $region12: #{ca_layer.1} parent=5 // pred_fallthru
        _
      %p151 = scmp.lt.s32.totalorder %s16, 2
      // Predicated region
      $region21: #{ca_layer.1} parent=5 // pred_check
        %p152 = pneg %p151
      $region22: #{ca_layer.1} parent=5 // pred_check_branch
        %154 = sbr.rel (%p152) target = $region24
      $region23: #{ca_layer.1} parent=5 // pred_region
        // Predicated region
        $region25: #{ca_layer.1} parent=23 // pred_check
          %p155 = pneg %p36
        $region26: #{ca_layer.1} parent=23 // pred_check_branch
          %157 = sbr.rel (%p155) target = $region28
        $region27: #{ca_layer.1} parent=23 // pred_region
          %s158 = sand.u32 %s26, 1
          %s159 = scalar_lea.sflag [#allocation3], %s158
          %s160 = sand.u32 %s26, 1
          %s161 = smul.addr %s160, 64
          %s162 = scalar_lea.vmem [#allocation2], %s161
          %s164 = ssub.s32 1024, 1024
          %165 = vsyncadd %s159, %s164
          %s166 = smul.addr %s16, 8
          %s167 = smul.addr %s166, 128
          %s168 = scalar_lea.hbm %s0, %s167
          %s169 = sshll.u32 %s162, 4
          %s170 = int_to_ptr.vmem [resolvable:$true] %s169
          %175 = dma.hbm_to_vmem [thread:$0]  %s168, 1024, %s170, %s159, 256, 256, 16
        $region28: #{ca_layer.1} parent=23 // pred_fallthru
          _
      $region24: #{ca_layer.1} parent=5 // pred_fallthru
        _
      %p176 = scmp.le.s32.totalorder 1, %s16
      %p177 = scmp.lt.s32.totalorder %s16, 3
      %p178 = pnand %p176, %p177
      %p179 = pneg %p178
      // Predicated region
      $region29: #{ca_layer.1} parent=5 // pred_check
        _
      $region30: #{ca_layer.1} parent=5 // pred_check_branch
        %181 = sbr.rel (%p178) target = $region32
      $region31: #{ca_layer.1} parent=5 // pred_region
        %s182 = ssub.s32 %s16, 1
        %s183 = sand.u32 %s29, 1
        %s184 = scalar_lea.sflag [#allocation3], %s183
        %s185 = sand.u32 %s29, 1
        %s186 = smul.addr %s185, 64
        %s187 = scalar_lea.vmem [#allocation2], %s186
        // Predicated region
        $region33: #{ca_layer.1} parent=31 // pred_check
          %p188 = pneg %p42
        $region34: #{ca_layer.1} parent=31 // pred_check_branch
          %190 = sbr.rel (%p188) target = $region36
        $region35: #{ca_layer.1} parent=31 // pred_region
          %191 = dma.done %s184, 1024
        $region36: #{ca_layer.1} parent=31 // pred_fallthru
          _
        // Predicated region
        $region37: #{ca_layer.1} parent=31 // pred_check
          %p192 = pneg %p63
        $region38: #{ca_layer.1} parent=31 // pred_check_branch
          %194 = sbr.rel (%p192) target = $region40
        $region39: #{ca_layer.1} parent=31 // pred_region
          %195 = dma.done [#allocation6], 512
        $region40: #{ca_layer.1} parent=31 // pred_fallthru
          _
        // Predicated region
        $region41: #{ca_layer.1} parent=31 // pred_check
          %p196 = pneg %p84
        $region42: #{ca_layer.1} parent=31 // pred_check_branch
          %198 = sbr.rel (%p196) target = $region44
        $region43: #{ca_layer.1} parent=31 // pred_region
          %199 = dma.done [#allocation6], 512
        $region44: #{ca_layer.1} parent=31 // pred_fallthru
          _
        %s200 = sand.u32 %s29, 1
        %s201 = scalar_lea.sflag [#allocation3], %s200
        %s202 = sand.u32 %s29, 1
        %s203 = smul.addr %s202, 64
        %s204 = scalar_lea.vmem [#allocation2], %s203
        %p205 = pneg %p42
        %p206 = pneg %p39
        %p207 = pneg %p63
        %p208 = pneg %p60
        %p209 = pneg %p84
        %p210 = pneg %p81
        %p211 = pneg %p110
        %p212 = pneg %p107
        %s213 = sand.u32 %s97, 1
        %s214 = scalar_lea.sflag [#allocation4], %s213
        %s215 = sand.u32 %s97, 1
        %s216 = smul.addr %s215, 64
        %s217 = scalar_lea.vmem [#allocation8], %s216
        %v218 = vld [vmem:[%s187] sm:$0xff]
        %v219 = vld [vmem:[%s187 + $0x8] sm:$0xff]
        %v220 = vld [vmem:[%s187 + $0x10] sm:$0xff]
        %v221 = vld [vmem:[%s187 + $0x18] sm:$0xff]
        %v222 = vld [vmem:[%s187 + $0x20] sm:$0xff]
        %v223 = vld [vmem:[%s187 + $0x28] sm:$0xff]
        %v224 = vld [vmem:[%s187 + $0x30] sm:$0xff]
        %v225 = vld [vmem:[%s187 + $0x38] sm:$0xff]
        %v226 = vadd.f32 %v218, %v219
        %227 = vadd.xlane.f32.xlu0 %v226
        %v228 = vpop.xlane.xlu0 %227
        %v229 = vadd.f32 %v220, %v221
        %230 = vadd.xlane.f32.xlu0 %v229
        %v231 = vpop.xlane.xlu0 %230
        %v232 = vadd.f32 %v222, %v223
        %233 = vadd.xlane.f32.xlu0 %v232
        %v234 = vpop.xlane.xlu0 %233
        %v235 = vadd.f32 %v224, %v225
        %236 = vadd.xlane.f32.xlu0 %v235
        %v237 = vpop.xlane.xlu0 %236
        %v238 = vmul.f32 %v228, 0.00390625
        %v239 = vmul.f32 %v231, 0.00390625
        %v240 = vmul.f32 %v234, 0.00390625
        %v241 = vmul.f32 %v237, 0.00390625
        %v242 = vld [vmem:[#allocation5] sm:$0xff]
        %v243 = vld [vmem:[#allocation5 + $0x8] sm:$0xff]
        %v244 = vld [vmem:[#allocation5 + $0x10] sm:$0xff]
        %v245 = vld [vmem:[#allocation5 + $0x18] sm:$0xff]
        %v246 = vmul.f32 %v242, %v238
        %v247 = vmul.f32 %v243, %v239
        %v248 = vmul.f32 %v244, %v240
        %v249 = vmul.f32 %v245, %v241
        %vm250 = vcmask 64512
        %v251 = vsel %vm250, %v246, 0.0
        %v252 = vsel %vm250, %v247, 0.0
        %v253 = vadd.f32 %v251, %v252
        %v254 = vsel %vm250, %v248, 0.0
        %v255 = vadd.f32 %v253, %v254
        %v256 = vsel %vm250, %v249, 0.0
        %v257 = vadd.f32 %v255, %v256
        %v258 = vrot.slane %v257, 4
        %v259 = vadd.f32 %v257, %v258
        %v260 = vrot.slane %v259, 2
        %v261 = vadd.f32 %v259, %v260
        %v262 = vrot.slane %v261, 1
        %v263 = vadd.f32 %v261, %v262
        %v264 = vmax.f32 %v263, 0.0
        %v265 = vld [vmem:[#allocation7] sm:$0xff]
        %v266 = vld [vmem:[#allocation7 + $0x8] sm:$0xff]
        %v267 = vld [vmem:[#allocation7 + $0x10] sm:$0xff]
        %v268 = vld [vmem:[#allocation7 + $0x18] sm:$0xff]
        %v269 = vmul.f32 %v265, %v264
        %v270 = vmul.f32 %v266, %v264
        %v271 = vmul.f32 %v267, %v264
        %v272 = vmul.f32 %v268, %v264
        %v273 = vsel %vm250, %v269, 0.0
        %274 = vadd.xlane.f32.xlu0 %v273
        %v275 = vpop.xlane.xlu0 %274
        %v276 = vsel %vm250, %v270, 0.0
        %277 = vadd.xlane.f32.xlu0 %v276
        %v278 = vpop.xlane.xlu0 %277
        %v279 = vsel %vm250, %v271, 0.0
        %280 = vadd.xlane.f32.xlu0 %v279
        %v281 = vpop.xlane.xlu0 %280
        %v282 = vsel %vm250, %v272, 0.0
        %283 = vadd.xlane.f32.xlu0 %v282
        %v284 = vpop.xlane.xlu0 %283
        %v285 = vxor.u32 %v275, 2147483648
        %v286 = vxor.u32 %v278, 2147483648
        %v287 = vxor.u32 %v281, 2147483648
        %v288 = vxor.u32 %v284, 2147483648
        %v289 = vmul.f32 %v285, 1.442695
        %v290 = vpow.pop %v289
        %v291 = vmul.f32 %v286, 1.442695
        %v292 = vpow.pop %v291
        %v293 = vmul.f32 %v287, 1.442695
        %v294 = vpow.pop %v293
        %v295 = vmul.f32 %v288, 1.442695
        %v296 = vpow.pop %v295
        %v297 = vadd.f32 %v290, 1.0
        %v298 = vadd.f32 %v292, 1.0
        %v299 = vadd.f32 %v294, 1.0
        %v300 = vadd.f32 %v296, 1.0
        %v301 = vrcp.pop %v297
        %v302 = vmul.f32 1.0, %v301
        %v303 = vrcp.pop %v298
        %v304 = vmul.f32 1.0, %v303
        %v305 = vrcp.pop %v299
        %v306 = vmul.f32 1.0, %v305
        %v307 = vrcp.pop %v300
        %v308 = vmul.f32 1.0, %v307
        %v309 = vmul.f32 %v218, %v302
        %v310 = vmul.f32 %v219, %v302
        %v311 = vmul.f32 %v220, %v304
        %v312 = vmul.f32 %v221, %v304
        %v313 = vmul.f32 %v222, %v306
        %v314 = vmul.f32 %v223, %v306
        %v315 = vmul.f32 %v224, %v308
        %v316 = vmul.f32 %v225, %v308
        %317 = vst [vmem:[%s217] sm:$0xff] %v309
        %318 = vst [vmem:[%s217 + $0x8] sm:$0xff] %v310
        %319 = vst [vmem:[%s217 + $0x10] sm:$0xff] %v311
        %320 = vst [vmem:[%s217 + $0x18] sm:$0xff] %v312
        %321 = vst [vmem:[%s217 + $0x20] sm:$0xff] %v313
        %322 = vst [vmem:[%s217 + $0x28] sm:$0xff] %v314
        %323 = vst [vmem:[%s217 + $0x30] sm:$0xff] %v315
        %324 = vst [vmem:[%s217 + $0x38] sm:$0xff] %v316
        %s325 = sand.u32 %s97, 1
        %s326 = scalar_lea.sflag [#allocation4], %s325
        %s327 = sand.u32 %s97, 1
        %s328 = smul.addr %s327, 64
        %s329 = scalar_lea.vmem [#allocation8], %s328
        // Predicated region
        $region45: #{ca_layer.1} parent=31 // pred_check
          %p330 = pneg %p107
        $region46: #{ca_layer.1} parent=31 // pred_check_branch
          %332 = sbr.rel (%p330) target = $region48
        $region47: #{ca_layer.1} parent=31 // pred_region
          %s334 = ssub.s32 1024, 1024
          %335 = vsyncadd %s326, %s334
          %s336 = smul.addr %s21, 8
          %s337 = smul.addr %s336, 128
          %s338 = scalar_lea.hbm %s3, %s337
          %s339 = sshll.u32 %s329, 4
          %s340 = int_to_ptr.vmem [resolvable:$true] %s339
          %345 = dma.vmem_to_hbm [thread:$0]  %s340, 1024, %s338, %s326, 256, 256, 16
        $region48: #{ca_layer.1} parent=31 // pred_fallthru
          _
      $region32: #{ca_layer.1} parent=5 // pred_fallthru
        _
      %p346 = scmp.le.s32.totalorder 2, %s16
      // Predicated region
      $region49: #{ca_layer.1} parent=5 // pred_check
        %p347 = pneg %p346
      $region50: #{ca_layer.1} parent=5 // pred_check_branch
        %349 = sbr.rel (%p347) target = $region52
      $region51: #{ca_layer.1} parent=5 // pred_region
        %s350 = ssub.s32 %s16, 2
        // Predicated region
        $region53: #{ca_layer.1} parent=51 // pred_check
          %p351 = pneg %p113
        $region54: #{ca_layer.1} parent=51 // pred_check_branch
          %353 = sbr.rel (%p351) target = $region56
        $region55: #{ca_layer.1} parent=51 // pred_region
          %s354 = sand.u32 %s98, 1
          %s355 = scalar_lea.sflag [#allocation4], %s354
          %s356 = sand.u32 %s98, 1
          %s357 = smul.addr %s356, 64
          %s358 = scalar_lea.vmem [#allocation8], %s357
          %359 = dma.done %s355, 1024
        $region56: #{ca_layer.1} parent=51 // pred_fallthru
          _
      $region52: #{ca_layer.1} parent=5 // pred_fallthru
        _
    $region6: #{ca_layer.1} parent=1 // loop_footer
      %s20 = sadd.s32 1, %s16
    $region7: #{ca_layer.1} parent=1 // loop_footer_branch
      %15 = sbr.rel target = $region3
    $region8: #{ca_layer.1} parent=1 // loop_exit
      _
    %360 = vsyncpa [#allocation3], 1
    %s361 = scalar_lea.sflag [#allocation3], 1
    %362 = vsyncpa %s361, 1
    %363 = vsyncpa [#allocation6], 1
    %364 = vsyncpa [#allocation4], 1
    %s365 = scalar_lea.sflag [#allocation4], 1
    %366 = vsyncpa %s365, 1

</llo_original>
